<compile_context>
chip_gen: v7x
topology: tpu7x:2x2x1
jax: 0.10.0
libtpu: 0.0.40
codegen_flags: <defaults>
</compile_context>

<pallas_src>
import functools

import jax
import jax.numpy as jnp
from jax.experimental import pallas as pl
from jax.experimental.pallas import tpu as pltpu


def _round_up(x, m):
    return ((x + m - 1) // m) * m


def _mlp_kernel(x_ref, w1_ref, b1_ref, w2_ref, b2_ref,
                w3_ref, b3_ref, w4_ref, b4_ref, o_ref, *, out_size):
    x = x_ref[...]  # bf16 (tile, F)

    # l1 + tanh   (bf16 MXU operands, f32 accumulate, f32 elementwise)
    h = jnp.dot(x, w1_ref[...], preferred_element_type=jnp.float32) + b1_ref[...]
    h = jnp.tanh(h)
    # l2 + relu
    h = jnp.dot(h.astype(jnp.bfloat16), w2_ref[...],
                preferred_element_type=jnp.float32) + b2_ref[...]
    h = jnp.maximum(h, 0.0)
    # l3 + tanh
    h = jnp.dot(h.astype(jnp.bfloat16), w3_ref[...],
                preferred_element_type=jnp.float32) + b3_ref[...]
    h = jnp.tanh(h)
    # l4 + relu  -> (tile, OUT_PAD); pad columns come out exactly 0
    h = jnp.dot(h.astype(jnp.bfloat16), w4_ref[...],
                preferred_element_type=jnp.float32) + b4_ref[...]
    h = jnp.maximum(h, 0.0)

    # log_softmax over the valid feature columns only (mask the lane padding
    # out of the max/sum so lse is correct), numerically stable, f32.
    col = jax.lax.broadcasted_iota(jnp.int32, h.shape, dimension=1)
    h = jnp.where(col < out_size, h, -1e30)
    m = jnp.max(h, axis=-1, keepdims=True)
    s = h - m
    lse = jnp.log(jnp.sum(jnp.exp(s), axis=-1, keepdims=True))
    # Full (tile, 128) unmasked store; pad columns hold garbage and are
    # sliced off in the wrapper.
    o_ref[...] = (s - lse).astype(o_ref.dtype)


def _pick_row_tile(M, requested):
    """Pick a sublane-aligned row tile: big enough to fill the MXU, small
    enough to avoid massive padding and to keep >=8 grid steps when M is
    large (v7x has 2 TensorCores sharded over parallel grid axes)."""
    m8 = _round_up(M, 8)
    tile = max(8, min(requested, m8))
    tile = (tile // 8) * 8
    while tile >= 512 and m8 // tile < 8:   # never shrink below 256
        tile //= 2
    return tile


@functools.partial(jax.jit, static_argnames=("row_tile",))
def neural_net_forward(x, params, *, row_tile=512):
    """x: (batch, seq, input_size) float32. Returns (batch, seq, output_size)."""
    w1, b1, w2, b2, w3, b3, w4, b4 = params
    B, S, F = x.shape
    out_size = w4.shape[1]
    out_pad = _round_up(max(out_size, 128), 128)   # lane-dense output width

    M = B * S
    tile = _pick_row_tile(M, row_tile)
    M_pad = _round_up(M, tile)

    x2 = x.reshape(M, F)
    if M_pad != M:
        x2 = jnp.pad(x2, ((0, M_pad - M), (0, 0)))
    # bf16 x stream: halves HBM read; matmul accumulates in f32.
    x2 = x2.astype(jnp.bfloat16)

    # bf16 weights for the MXU; biases stay f32 (VPU work stays f32).
    w1b = w1.astype(jnp.bfloat16)
    w2b = w2.astype(jnp.bfloat16)
    w3b = w3.astype(jnp.bfloat16)
    w4b = jnp.pad(w4, ((0, 0), (0, out_pad - out_size))).astype(jnp.bfloat16)
    b4p = jnp.pad(b4, ((0, 0), (0, out_pad - out_size)))

    grid = (M_pad // tile,)

    def full(shape):
        # Constant index_map -> weights/biases DMA'd once, VMEM-resident.
        return pl.BlockSpec(shape, lambda i: (0, 0))

    kernel = functools.partial(_mlp_kernel, out_size=out_size)

    out = pl.pallas_call(
        kernel,
        out_shape=jax.ShapeDtypeStruct((M_pad, out_pad), jnp.float32),
        grid_spec=pltpu.PrefetchScalarGridSpec(
            num_scalar_prefetch=0,
            grid=grid,
            in_specs=[
                pl.BlockSpec((tile, F), lambda i: (i, 0)),   # x rows (streamed)
                full(w1b.shape), full(b1.shape),
                full(w2b.shape), full(b2.shape),
                full(w3b.shape), full(b3.shape),
                full(w4b.shape), full(b4p.shape),
            ],
            out_specs=pl.BlockSpec((tile, out_pad), lambda i: (i, 0)),
        ),
        compiler_params=pltpu.CompilerParams(
            dimension_semantics=("parallel",)),
    )(x2, w1b, b1, w2b, b2, w3b, b3, w4b, b4p)

    return out[:M, :out_size].reshape(B, S, out_size)


def init_params(key, input_size, output_size):
    """Deterministic init mimicking PyTorch Linear's U(-1/sqrt(in), 1/sqrt(in)).
    Weights stored (in_features, out_features); biases stored (1, out_features)."""
    dims = [(input_size, 128), (128, 64), (64, 32), (32, output_size)]
    params = []
    for (fan_in, fan_out) in dims:
        key, kw, kb = jax.random.split(key, 3)
        bound = 1.0 / jnp.sqrt(float(fan_in))
        w = jax.random.uniform(kw, (fan_in, fan_out), jnp.float32, -bound, bound)
        b = jax.random.uniform(kb, (1, fan_out), jnp.float32, -bound, bound)
        params += [w, b]
    return tuple(params)


def _reference(x, params):
    # Pure f32 reference matching the PyTorch module's forward.
    w1, b1, w2, b2, w3, b3, w4, b4 = params
    h = jnp.tanh(x @ w1 + b1[0])
    h = jax.nn.relu(h @ w2 + b2[0])
    h = jnp.tanh(h @ w3 + b3[0])
    h = jax.nn.relu(h @ w4 + b4[0])
    return jax.nn.log_softmax(h, axis=2)


if __name__ == "__main__":
    key = jax.random.PRNGKey(0)
    k_param, k_x1, k_x2 = jax.random.split(key, 3)

    input_size = 256   # small stand-in for MNIST's 784
    output_size = 10

    params = init_params(k_param, input_size, output_size)

    # Case 1: tiny input (single-tile path), matches the module's 3-D layout.
    B, S = 2, 4
    x = jax.random.normal(k_x1, (B, S, input_size), jnp.float32)
    out = jax.block_until_ready(neural_net_forward(x, params))
    ref = _reference(x, params)
    assert out.shape == (B, S, output_size)
    # bf16 MXU operands -> loosened tolerance vs the f32 reference.
    assert jnp.allclose(out, ref, atol=3e-2, rtol=3e-2)

    # Case 2: larger row count to exercise the multi-tile grid + padding path.
    B2, S2 = 4, 300
    x2 = jax.random.normal(k_x2, (B2, S2, input_size), jnp.float32)
    out2 = jax.block_until_ready(neural_net_forward(x2, params))
    ref2 = _reference(x2, params)
    assert out2.shape == (B2, S2, output_size)
    assert jnp.allclose(out2, ref2, atol=3e-2, rtol=3e-2)

    print("KERNEL_OK")
</pallas_src>

<mosaic_0001>
module attributes {stable_mosaic.version = 11 : i64} {
  func.func @_mlp_kernel(%arg0: i32, %arg1: memref<8x256xbf16, #tpu.memory_space<vmem>>, %arg2: memref<256x128xbf16, #tpu.memory_space<vmem>>, %arg3: memref<1x128xf32, #tpu.memory_space<vmem>>, %arg4: memref<128x64xbf16, #tpu.memory_space<vmem>>, %arg5: memref<1x64xf32, #tpu.memory_space<vmem>>, %arg6: memref<64x32xbf16, #tpu.memory_space<vmem>>, %arg7: memref<1x32xf32, #tpu.memory_space<vmem>>, %arg8: memref<32x128xbf16, #tpu.memory_space<vmem>>, %arg9: memref<1x128xf32, #tpu.memory_space<vmem>>, %arg10: memref<8x128xf32, #tpu.memory_space<vmem>>) attributes {dimension_semantics = [#tpu.dimension_semantics<parallel>], iteration_bounds = array<i64: 1>, scalar_prefetch = 0 : i64, scratch_operands = 0 : i64, tpu.core_type = #tpu.core_type<tc>, window_params = [{transform_indices = @transform_0, window_bounds = array<i64: 8, 256>}, {pipeline_mode = #tpu.pipeline_mode<synchronous>, transform_indices = @transform_1, window_bounds = array<i64: 256, 128>}, {pipeline_mode = #tpu.pipeline_mode<synchronous>, transform_indices = @transform_2, window_bounds = array<i64: 1, 128>}, {pipeline_mode = #tpu.pipeline_mode<synchronous>, transform_indices = @transform_3, window_bounds = array<i64: 128, 64>}, {pipeline_mode = #tpu.pipeline_mode<synchronous>, transform_indices = @transform_4, window_bounds = array<i64: 1, 64>}, {pipeline_mode = #tpu.pipeline_mode<synchronous>, transform_indices = @transform_5, window_bounds = array<i64: 64, 32>}, {pipeline_mode = #tpu.pipeline_mode<synchronous>, transform_indices = @transform_6, window_bounds = array<i64: 1, 32>}, {pipeline_mode = #tpu.pipeline_mode<synchronous>, transform_indices = @transform_7, window_bounds = array<i64: 32, 128>}, {pipeline_mode = #tpu.pipeline_mode<synchronous>, transform_indices = @transform_8, window_bounds = array<i64: 1, 128>}, {transform_indices = @transform_9, window_bounds = array<i64: 8, 128>}]} {
    %c0 = arith.constant 0 : index
    %c0_0 = arith.constant 0 : index
    %0 = vector.load %arg1[%c0, %c0_0] : memref<8x256xbf16, #tpu.memory_space<vmem>>, vector<8x256xbf16>
    %c0_1 = arith.constant 0 : index
    %c0_2 = arith.constant 0 : index
    %1 = vector.load %arg2[%c0_1, %c0_2] : memref<256x128xbf16, #tpu.memory_space<vmem>>, vector<256x128xbf16>
    %cst = arith.constant dense<0.000000e+00> : vector<8x128xf32>
    %2 = tpu.matmul %0, %1, %cst {dimension_numbers = #tpu.dot_dimension_numbers<[1], [0], [0], [1], [0, 0, 1, 1], [], []>} : vector<8x256xbf16>, vector<256x128xbf16>, vector<8x128xf32> -> vector<8x128xf32>
    %c0_3 = arith.constant 0 : index
    %c0_4 = arith.constant 0 : index
    %3 = vector.load %arg3[%c0_3, %c0_4] : memref<1x128xf32, #tpu.memory_space<vmem>>, vector<1x128xf32>
    %4 = vector.broadcast %3 : vector<1x128xf32> to vector<8x128xf32>
    %5 = arith.addf %2, %4 : vector<8x128xf32>
    %6 = math.tanh %5 : vector<8x128xf32>
    %7 = arith.truncf %6 : vector<8x128xf32> to vector<8x128xbf16>
    %c0_5 = arith.constant 0 : index
    %c0_6 = arith.constant 0 : index
    %8 = vector.load %arg4[%c0_5, %c0_6] : memref<128x64xbf16, #tpu.memory_space<vmem>>, vector<128x64xbf16>
    %cst_7 = arith.constant dense<0.000000e+00> : vector<8x64xf32>
    %9 = tpu.matmul %7, %8, %cst_7 {dimension_numbers = #tpu.dot_dimension_numbers<[1], [0], [0], [1], [0, 0, 1, 1], [], []>} : vector<8x128xbf16>, vector<128x64xbf16>, vector<8x64xf32> -> vector<8x64xf32>
    %c0_8 = arith.constant 0 : index
    %c0_9 = arith.constant 0 : index
    %10 = vector.load %arg5[%c0_8, %c0_9] : memref<1x64xf32, #tpu.memory_space<vmem>>, vector<1x64xf32>
    %11 = vector.broadcast %10 : vector<1x64xf32> to vector<8x64xf32>
    %12 = arith.addf %9, %11 : vector<8x64xf32>
    %cst_10 = arith.constant 0.000000e+00 : f32
    %13 = vector.broadcast %cst_10 : f32 to vector<8x64xf32>
    %14 = arith.maximumf %12, %13 : vector<8x64xf32>
    %15 = arith.truncf %14 : vector<8x64xf32> to vector<8x64xbf16>
    %c0_11 = arith.constant 0 : index
    %c0_12 = arith.constant 0 : index
    %16 = vector.load %arg6[%c0_11, %c0_12] : memref<64x32xbf16, #tpu.memory_space<vmem>>, vector<64x32xbf16>
    %cst_13 = arith.constant dense<0.000000e+00> : vector<8x32xf32>
    %17 = tpu.matmul %15, %16, %cst_13 {dimension_numbers = #tpu.dot_dimension_numbers<[1], [0], [0], [1], [0, 0, 1, 1], [], []>} : vector<8x64xbf16>, vector<64x32xbf16>, vector<8x32xf32> -> vector<8x32xf32>
    %c0_14 = arith.constant 0 : index
    %c0_15 = arith.constant 0 : index
    %18 = vector.load %arg7[%c0_14, %c0_15] : memref<1x32xf32, #tpu.memory_space<vmem>>, vector<1x32xf32>
    %19 = vector.broadcast %18 : vector<1x32xf32> to vector<8x32xf32>
    %20 = arith.addf %17, %19 : vector<8x32xf32>
    %21 = math.tanh %20 : vector<8x32xf32>
    %22 = arith.truncf %21 : vector<8x32xf32> to vector<8x32xbf16>
    %c0_16 = arith.constant 0 : index
    %c0_17 = arith.constant 0 : index
    %23 = vector.load %arg8[%c0_16, %c0_17] : memref<32x128xbf16, #tpu.memory_space<vmem>>, vector<32x128xbf16>
    %cst_18 = arith.constant dense<0.000000e+00> : vector<8x128xf32>
    %24 = tpu.matmul %22, %23, %cst_18 {dimension_numbers = #tpu.dot_dimension_numbers<[1], [0], [0], [1], [0, 0, 1, 1], [], []>} : vector<8x32xbf16>, vector<32x128xbf16>, vector<8x128xf32> -> vector<8x128xf32>
    %c0_19 = arith.constant 0 : index
    %c0_20 = arith.constant 0 : index
    %25 = vector.load %arg9[%c0_19, %c0_20] : memref<1x128xf32, #tpu.memory_space<vmem>>, vector<1x128xf32>
    %26 = vector.broadcast %25 : vector<1x128xf32> to vector<8x128xf32>
    %27 = arith.addf %24, %26 : vector<8x128xf32>
    %cst_21 = arith.constant 0.000000e+00 : f32
    %28 = vector.broadcast %cst_21 : f32 to vector<8x128xf32>
    %29 = arith.maximumf %27, %28 : vector<8x128xf32>
    %30 = tpu.iota {dimensions = array<i32: 1>} : vector<8x128xi32>
    %c10_i32 = arith.constant 10 : i32
    %31 = vector.broadcast %c10_i32 : i32 to vector<8x128xi32>
    %32 = arith.cmpi slt, %30, %31 : vector<8x128xi32>
    %cst_22 = arith.constant -1.000000e+30 : f32
    %33 = vector.broadcast %cst_22 : f32 to vector<8x128xf32>
    %34 = arith.select %32, %29, %33 : vector<8x128xi1>, vector<8x128xf32>
    %cst_23 = arith.constant dense<0xFF800000> : vector<8xf32>
    %35 = vector.multi_reduction <maximumf>, %34, %cst_23 [1] : vector<8x128xf32> to vector<8xf32>
    %36 = vector.shape_cast %35 : vector<8xf32> to vector<8x1xf32>
    %37 = vector.broadcast %36 : vector<8x1xf32> to vector<8x128xf32>
    %38 = arith.subf %34, %37 : vector<8x128xf32>
    %39 = math.exp %38 : vector<8x128xf32>
    %cst_24 = arith.constant dense<0.000000e+00> : vector<8xf32>
    %40 = vector.multi_reduction <add>, %39, %cst_24 [1] : vector<8x128xf32> to vector<8xf32>
    %41 = vector.shape_cast %40 : vector<8xf32> to vector<8x1xf32>
    %42 = math.log %41 : vector<8x1xf32>
    %43 = vector.broadcast %42 : vector<8x1xf32> to vector<8x128xf32>
    %44 = arith.subf %38, %43 : vector<8x128xf32>
    %c0_25 = arith.constant 0 : index
    %c0_26 = arith.constant 0 : index
    %45 = vector.load %arg10[%c0_25, %c0_26] : memref<8x128xf32, #tpu.memory_space<vmem>>, vector<8x128xf32>
    tpu.vector_store %arg10[%c0_25, %c0_26], %44 {strides = array<i32>} : memref<8x128xf32, #tpu.memory_space<vmem>>, vector<8x128xf32>,
    return
  }
  func.func @transform_0(%arg0: i32) -> (i32, i32) {
    %c0_i32 = arith.constant 0 : i32
    %c0_i32_0 = arith.constant 0 : i32
    return %arg0, %c0_i32 : i32, i32
  }
  func.func @transform_1(%arg0: i32) -> (i32, i32) {
    %c0_i32 = arith.constant 0 : i32
    %c0_i32_0 = arith.constant 0 : i32
    %c0_i32_1 = arith.constant 0 : i32
    return %c0_i32, %c0_i32_0 : i32, i32
  }
  func.func @transform_2(%arg0: i32) -> (i32, i32) {
    %c0_i32 = arith.constant 0 : i32
    %c0_i32_0 = arith.constant 0 : i32
    %c0_i32_1 = arith.constant 0 : i32
    return %c0_i32, %c0_i32_0 : i32, i32
  }
  func.func @transform_3(%arg0: i32) -> (i32, i32) {
    %c0_i32 = arith.constant 0 : i32
    %c0_i32_0 = arith.constant 0 : i32
    %c0_i32_1 = arith.constant 0 : i32
    return %c0_i32, %c0_i32_0 : i32, i32
  }
  func.func @transform_4(%arg0: i32) -> (i32, i32) {
    %c0_i32 = arith.constant 0 : i32
    %c0_i32_0 = arith.constant 0 : i32
    %c0_i32_1 = arith.constant 0 : i32
    return %c0_i32, %c0_i32_0 : i32, i32
  }
  func.func @transform_5(%arg0: i32) -> (i32, i32) {
    %c0_i32 = arith.constant 0 : i32
    %c0_i32_0 = arith.constant 0 : i32
    %c0_i32_1 = arith.constant 0 : i32
    return %c0_i32, %c0_i32_0 : i32, i32
  }
  func.func @transform_6(%arg0: i32) -> (i32, i32) {
    %c0_i32 = arith.constant 0 : i32
    %c0_i32_0 = arith.constant 0 : i32
    %c0_i32_1 = arith.constant 0 : i32
    return %c0_i32, %c0_i32_0 : i32, i32
  }
  func.func @transform_7(%arg0: i32) -> (i32, i32) {
    %c0_i32 = arith.constant 0 : i32
    %c0_i32_0 = arith.constant 0 : i32
    %c0_i32_1 = arith.constant 0 : i32
    return %c0_i32, %c0_i32_0 : i32, i32
  }
  func.func @transform_8(%arg0: i32) -> (i32, i32) {
    %c0_i32 = arith.constant 0 : i32
    %c0_i32_0 = arith.constant 0 : i32
    %c0_i32_1 = arith.constant 0 : i32
    return %c0_i32, %c0_i32_0 : i32, i32
  }
  func.func @transform_9(%arg0: i32) -> (i32, i32) {
    %c0_i32 = arith.constant 0 : i32
    %c0_i32_0 = arith.constant 0 : i32
    return %arg0, %c0_i32 : i32, i32
  }
}

</mosaic_0001>

<llo_original>
// kernel: neural_net_forward.1
$region0: #{neural_net_forward.1}
  #allocation0 [shape = 'u32[]', space=smem, size = 0x4, offset = 0x4, fixed_abs, tag = 'smem constant byte address 0x4 - core index']
  #allocation1 [shape = 'u32[144,128]{1,0:T(1,128)}', space=vmem, size = 0x12000, scoped, tag = 'internal scratch']
  %s0 = inlined_call_operand.vmem [shape: bf16[8,256], index: 0, kind: input, shape index: {}]
  %s1 = inlined_call_operand.vmem [shape: bf16[256,128], index: 1, kind: input, shape index: {}]
  %s2 = inlined_call_operand.vmem [shape: f32[1,128], index: 2, kind: input, shape index: {}]
  %s3 = inlined_call_operand.vmem [shape: bf16[128,64], index: 3, kind: input, shape index: {}]
  %s4 = inlined_call_operand.vmem [shape: f32[1,64], index: 4, kind: input, shape index: {}]
  %s5 = inlined_call_operand.vmem [shape: bf16[64,32], index: 5, kind: input, shape index: {}]
  %s6 = inlined_call_operand.vmem [shape: f32[1,32], index: 6, kind: input, shape index: {}]
  %s7 = inlined_call_operand.vmem [shape: bf16[32,128], index: 7, kind: input, shape index: {}]
  %s8 = inlined_call_operand.vmem [shape: f32[1,128], index: 8, kind: input, shape index: {}]
  %s9 = inlined_call_operand.hbm [shape: f32[8,128], index: 9, kind: output, shape index: {}]
  %s10 = sld [smem:[#allocation0]]
  $region46: #{neural_net_forward.1} parent=0
    _
  %s12 = ssub.s32 1, %s10
  %s13 = scalar_select 0, %s12, %s10
  $region1: #{neural_net_forward.1} parent=0
    #allocation2 [shape = 'u8[4096]{0}', space=vmem, size = 0x1000, scoped, tag = 'output window, operand 0, single buffered']
    #allocation3 [shape = 's32[1]{0}', space=sflag, size = 0x4, scoped, tag = 'scoped memory for neural_net_forward.1']
    %14 = vsyncpa [#allocation3], 0
    // Predicated region
    $region2: #{neural_net_forward.1} parent=1 // pred_check
      _
    $region3: #{neural_net_forward.1} parent=1 // pred_check_branch
      %16 = sbr.rel (0) target = $region5
    $region4: #{neural_net_forward.1} parent=1 // pred_region
      _
    $region5: #{neural_net_forward.1} parent=1 // pred_fallthru
      _
    // Predicated region
    $region6: #{neural_net_forward.1} parent=1 // pred_check
      _
    $region7: #{neural_net_forward.1} parent=1 // pred_check_branch
      %18 = sbr.rel (0) target = $region9
    $region8: #{neural_net_forward.1} parent=1 // pred_region
      _
    $region9: #{neural_net_forward.1} parent=1 // pred_fallthru
      _
    // Predicated region
    $region10: #{neural_net_forward.1} parent=1 // pred_check
      _
    $region11: #{neural_net_forward.1} parent=1 // pred_check_branch
      %20 = sbr.rel (0) target = $region13
    $region12: #{neural_net_forward.1} parent=1 // pred_region
      _
    $region13: #{neural_net_forward.1} parent=1 // pred_fallthru
      _
    // Predicated region
    $region14: #{neural_net_forward.1} parent=1 // pred_check
      _
    $region15: #{neural_net_forward.1} parent=1 // pred_check_branch
      %22 = sbr.rel (0) target = $region17
    $region16: #{neural_net_forward.1} parent=1 // pred_region
      _
    $region17: #{neural_net_forward.1} parent=1 // pred_fallthru
      _
    // Predicated region
    $region18: #{neural_net_forward.1} parent=1 // pred_check
      _
    $region19: #{neural_net_forward.1} parent=1 // pred_check_branch
      %24 = sbr.rel (0) target = $region21
    $region20: #{neural_net_forward.1} parent=1 // pred_region
      _
    $region21: #{neural_net_forward.1} parent=1 // pred_fallthru
      _
    // Predicated region
    $region22: #{neural_net_forward.1} parent=1 // pred_check
      _
    $region23: #{neural_net_forward.1} parent=1 // pred_check_branch
      %26 = sbr.rel (0) target = $region25
    $region24: #{neural_net_forward.1} parent=1 // pred_region
      _
    $region25: #{neural_net_forward.1} parent=1 // pred_fallthru
      _
    // Predicated region
    $region26: #{neural_net_forward.1} parent=1 // pred_check
      _
    $region27: #{neural_net_forward.1} parent=1 // pred_check_branch
      %28 = sbr.rel (0) target = $region29
    $region28: #{neural_net_forward.1} parent=1 // pred_region
      _
    $region29: #{neural_net_forward.1} parent=1 // pred_fallthru
      _
    // Predicated region
    $region30: #{neural_net_forward.1} parent=1 // pred_check
      _
    $region31: #{neural_net_forward.1} parent=1 // pred_check_branch
      %30 = sbr.rel (0) target = $region33
    $region32: #{neural_net_forward.1} parent=1 // pred_region
      _
    $region33: #{neural_net_forward.1} parent=1 // pred_fallthru
      _
    // Predicated region
    $region34: #{neural_net_forward.1} parent=1 // pred_check
      _
    $region35: #{neural_net_forward.1} parent=1 // pred_check_branch
      %32 = sbr.rel (0) target = $region37
    $region36: #{neural_net_forward.1} parent=1 // pred_region
      _
    $region37: #{neural_net_forward.1} parent=1 // pred_fallthru
      _
    %v34 = vld [vmem:[%s0] sm:$0xff]
    %v35 = vld [vmem:[%s1] sm:$0xf]
    %v36 = vld [vmem:[%s1 + $0x4] sm:$0xf]
    %v37 = vld [vmem:[%s1 + $0x8] sm:$0xf]
    %v38 = vld [vmem:[%s1 + $0xc] sm:$0xf]
    %v39 = vld [vmem:[%s1 + $0x10] sm:$0xf]
    %v40 = vld [vmem:[%s1 + $0x14] sm:$0xf]
    %v41 = vld [vmem:[%s1 + $0x18] sm:$0xf]
    %v42 = vld [vmem:[%s1 + $0x1c] sm:$0xf]
    %v43 = vld [vmem:[%s1 + $0x20] sm:$0xf]
    %v44 = vld [vmem:[%s1 + $0x24] sm:$0xf]
    %v45 = vld [vmem:[%s1 + $0x28] sm:$0xf]
    %v46 = vld [vmem:[%s1 + $0x2c] sm:$0xf]
    %v47 = vld [vmem:[%s1 + $0x30] sm:$0xf]
    %v48 = vld [vmem:[%s1 + $0x34] sm:$0xf]
    %v49 = vld [vmem:[%s1 + $0x38] sm:$0xf]
    %v50 = vld [vmem:[%s1 + $0x3c] sm:$0xf]
    %v51 = vld [vmem:[%s1 + $0x40] sm:$0xf]
    %v52 = vld [vmem:[%s1 + $0x44] sm:$0xf]
    %v53 = vld [vmem:[%s1 + $0x48] sm:$0xf]
    %v54 = vld [vmem:[%s1 + $0x4c] sm:$0xf]
    %v55 = vld [vmem:[%s1 + $0x50] sm:$0xf]
    %v56 = vld [vmem:[%s1 + $0x54] sm:$0xf]
    %v57 = vld [vmem:[%s1 + $0x58] sm:$0xf]
    %v58 = vld [vmem:[%s1 + $0x5c] sm:$0xf]
    %v59 = vld [vmem:[%s1 + $0x60] sm:$0xf]
    %v60 = vld [vmem:[%s1 + $0x64] sm:$0xf]
    %v61 = vld [vmem:[%s1 + $0x68] sm:$0xf]
    %v62 = vld [vmem:[%s1 + $0x6c] sm:$0xf]
    %v63 = vld [vmem:[%s1 + $0x70] sm:$0xf]
    %v64 = vld [vmem:[%s1 + $0x74] sm:$0xf]
    %v65 = vld [vmem:[%s1 + $0x78] sm:$0xf]
    %v66 = vld [vmem:[%s1 + $0x7c] sm:$0xf]
    %v67 = vld [vmem:[%s2] sm:$0x1]
    %v69 = vlaneseq
    %v70 = vshrl.u32 %v69, 7
    %v71 = vsub.s32 0, %v70
    %v72 = vrot.slane %v67, %v71
    %v75 = vunpack.c.l.b16 %v34
    %v76 = vunpack.c.h.b16 %v34
    %v77 = vpack.c.b16 %v75, %v75
    %v78 = vpack.c.b16 %v76, %v76
    %v113 = vunpack.c.l.b16 %v35
    %v114 = vunpack.c.l.b16 %v36
    %v115 = vunpack.c.l.b16 %v37
    %v116 = vunpack.c.l.b16 %v38
    %v117 = vunpack.c.l.b16 %v39
    %v118 = vunpack.c.l.b16 %v40
    %v119 = vunpack.c.l.b16 %v41
    %v120 = vunpack.c.l.b16 %v42
    %v121 = vunpack.c.l.b16 %v43
    %v122 = vunpack.c.l.b16 %v44
    %v123 = vunpack.c.l.b16 %v45
    %v124 = vunpack.c.l.b16 %v46
    %v125 = vunpack.c.l.b16 %v47
    %v126 = vunpack.c.l.b16 %v48
    %v127 = vunpack.c.l.b16 %v49
    %v128 = vunpack.c.l.b16 %v50
    %v129 = vunpack.c.l.b16 %v51
    %v130 = vunpack.c.l.b16 %v52
    %v131 = vunpack.c.l.b16 %v53
    %v132 = vunpack.c.l.b16 %v54
    %v133 = vunpack.c.l.b16 %v55
    %v134 = vunpack.c.l.b16 %v56
    %v135 = vunpack.c.l.b16 %v57
    %v136 = vunpack.c.l.b16 %v58
    %v137 = vunpack.c.l.b16 %v59
    %v138 = vunpack.c.l.b16 %v60
    %v139 = vunpack.c.l.b16 %v61
    %v140 = vunpack.c.l.b16 %v62
    %v141 = vunpack.c.l.b16 %v63
    %v142 = vunpack.c.l.b16 %v64
    %v143 = vunpack.c.l.b16 %v65
    %v144 = vunpack.c.l.b16 %v66
    %v145 = vpack.c.b16 %v114, %v113
    %v146 = vpack.c.b16 %v116, %v115
    %v147 = vpack.c.b16 %v118, %v117
    %v148 = vpack.c.b16 %v120, %v119
    %v149 = vpack.c.b16 %v122, %v121
    %v150 = vpack.c.b16 %v124, %v123
    %v151 = vpack.c.b16 %v126, %v125
    %v152 = vpack.c.b16 %v128, %v127
    %v153 = vpack.c.b16 %v130, %v129
    %v154 = vpack.c.b16 %v132, %v131
    %v155 = vpack.c.b16 %v134, %v133
    %v156 = vpack.c.b16 %v136, %v135
    %v157 = vpack.c.b16 %v138, %v137
    %v158 = vpack.c.b16 %v140, %v139
    %v159 = vpack.c.b16 %v142, %v141
    %v160 = vpack.c.b16 %v144, %v143
    %177 = vmatprep.subr.bf16.mxu0 0
    %178 = vmatpush1.bf16.msra.mxu0 %v145
    %179 = vmatprep.subr.bf16.mxu0 0
    %180 = vmatpush1.bf16.msra.mxu0 %v146
    %181 = vmatprep.subr.bf16.mxu0 0
    %182 = vmatpush1.bf16.msra.mxu0 %v147
    %183 = vmatprep.subr.bf16.mxu0 0
    %184 = vmatpush1.bf16.msra.mxu0 %v148
    %185 = vmatprep.subr.bf16.mxu0 0
    %186 = vmatpush1.bf16.msra.mxu0 %v149
    %187 = vmatprep.subr.bf16.mxu0 0
    %188 = vmatpush1.bf16.msra.mxu0 %v150
    %189 = vmatprep.subr.bf16.mxu0 0
    %190 = vmatpush1.bf16.msra.mxu0 %v151
    %191 = vmatprep.subr.bf16.mxu0 0
    %192 = vmatpush1.bf16.msra.mxu0 %v152
    %193 = vmatprep.subr.bf16.mxu0 0
    %194 = vmatpush1.bf16.msra.mxu0 %v153
    %195 = vmatprep.subr.bf16.mxu0 0
    %196 = vmatpush1.bf16.msra.mxu0 %v154
    %197 = vmatprep.subr.bf16.mxu0 0
    %198 = vmatpush1.bf16.msra.mxu0 %v155
    %199 = vmatprep.subr.bf16.mxu0 0
    %200 = vmatpush1.bf16.msra.mxu0 %v156
    %201 = vmatprep.subr.bf16.mxu0 0
    %202 = vmatpush1.bf16.msra.mxu0 %v157
    %203 = vmatprep.subr.bf16.mxu0 0
    %204 = vmatpush1.bf16.msra.mxu0 %v158
    %205 = vmatprep.subr.bf16.mxu0 0
    %206 = vmatpush1.bf16.msra.mxu0 %v159
    %207 = vmatprep.subr.bf16.mxu0 0
    %208 = vmatpush1.bf16.msra.mxu0 %v160
    %209 = vmatprep.mubr.bf16.mxu0 %v78
    %210 = vmatmul.mubr.bf16.gmra.mrb[0].mxu0 %v77
    %v211 = vpop.f32.mrb[0].mxu0
    %v212 = vadd.f32 %v72, %v211
    %v213 = vpop.f32.mrb[0].mxu0
    %v214 = vpop.f32.mrb[0].mxu0
    %v215 = vpop.f32.mrb[0].mxu0
    %216 = vdwg.mxu0
    %v217 = vtanh.pop %v212
    %v218 = vpack.c.bf16 %v217, %v217
    %v219 = vld [vmem:[%s3] sm:$0xf]
    %v220 = vld [vmem:[%s3 + $0x4] sm:$0xf]
    %v221 = vld [vmem:[%s3 + $0x8] sm:$0xf]
    %v222 = vld [vmem:[%s3 + $0xc] sm:$0xf]
    %v223 = vld [vmem:[%s3 + $0x10] sm:$0xf]
    %v224 = vld [vmem:[%s3 + $0x14] sm:$0xf]
    %v225 = vld [vmem:[%s3 + $0x18] sm:$0xf]
    %v226 = vld [vmem:[%s3 + $0x1c] sm:$0xf]
    %v227 = vld [vmem:[%s3 + $0x20] sm:$0xf]
    %v228 = vld [vmem:[%s3 + $0x24] sm:$0xf]
    %v229 = vld [vmem:[%s3 + $0x28] sm:$0xf]
    %v230 = vld [vmem:[%s3 + $0x2c] sm:$0xf]
    %v231 = vld [vmem:[%s3 + $0x30] sm:$0xf]
    %v232 = vld [vmem:[%s3 + $0x34] sm:$0xf]
    %v233 = vld [vmem:[%s3 + $0x38] sm:$0xf]
    %v234 = vld [vmem:[%s3 + $0x3c] sm:$0xf]
    %v235 = vld [vmem:[%s4] sm:$0x1]
    %v237 = vlaneseq
    %v238 = vshrl.u32 %v237, 7
    %v239 = vsub.s32 0, %v238
    %v240 = vrot.slane %v235, %v239
    %v258 = vunpack.c.l.b16 %v219
    %v259 = vunpack.c.l.b16 %v220
    %v260 = vunpack.c.l.b16 %v221
    %v261 = vunpack.c.l.b16 %v222
    %v262 = vunpack.c.l.b16 %v223
    %v263 = vunpack.c.l.b16 %v224
    %v264 = vunpack.c.l.b16 %v225
    %v265 = vunpack.c.l.b16 %v226
    %v266 = vunpack.c.l.b16 %v227
    %v267 = vunpack.c.l.b16 %v228
    %v268 = vunpack.c.l.b16 %v229
    %v269 = vunpack.c.l.b16 %v230
    %v270 = vunpack.c.l.b16 %v231
    %v271 = vunpack.c.l.b16 %v232
    %v272 = vunpack.c.l.b16 %v233
    %v273 = vunpack.c.l.b16 %v234
    %v274 = vpack.c.b16 %v259, %v258
    %v275 = vpack.c.b16 %v261, %v260
    %v276 = vpack.c.b16 %v263, %v262
    %v277 = vpack.c.b16 %v265, %v264
    %v278 = vpack.c.b16 %v267, %v266
    %v279 = vpack.c.b16 %v269, %v268
    %v280 = vpack.c.b16 %v271, %v270
    %v281 = vpack.c.b16 %v273, %v272
    %290 = vmatprep.subr.bf16.mxu0 0
    %291 = vmatpush1.bf16.msra.mxu0 %v274
    %292 = vmatprep.subr.bf16.mxu0 0
    %293 = vmatpush1.bf16.msra.mxu0 %v275
    %294 = vmatprep.subr.bf16.mxu0 0
    %295 = vmatpush1.bf16.msra.mxu0 %v276
    %296 = vmatprep.subr.bf16.mxu0 0
    %297 = vmatpush1.bf16.msra.mxu0 %v277
    %298 = vmatprep.subr.bf16.mxu0 0
    %299 = vmatpush1.bf16.msra.mxu0 %v278
    %300 = vmatprep.subr.bf16.mxu0 0
    %301 = vmatpush1.bf16.msra.mxu0 %v279
    %302 = vmatprep.subr.bf16.mxu0 0
    %303 = vmatpush1.bf16.msra.mxu0 %v280
    %304 = vmatprep.subr.bf16.mxu0 0
    %305 = vmatpush1.bf16.msra.mxu0 %v281
    %306 = vmatprep.subr.bf16.mxu0 0
    %307 = vmatpush1.bf16.msra.mxu0 0
    %308 = vmatprep.subr.bf16.mxu0 0
    %309 = vmatpush1.bf16.msra.mxu0 0
    %310 = vmatprep.subr.bf16.mxu0 0
    %311 = vmatpush1.bf16.msra.mxu0 0
    %312 = vmatprep.subr.bf16.mxu0 0
    %313 = vmatpush1.bf16.msra.mxu0 0
    %314 = vmatprep.subr.bf16.mxu0 0
    %315 = vmatpush1.bf16.msra.mxu0 0
    %316 = vmatprep.subr.bf16.mxu0 0
    %317 = vmatpush1.bf16.msra.mxu0 0
    %318 = vmatprep.subr.bf16.mxu0 0
    %319 = vmatpush1.bf16.msra.mxu0 0
    %320 = vmatprep.subr.bf16.mxu0 0
    %321 = vmatpush1.bf16.msra.mxu0 0
    %322 = vmatprep.mubr.bf16.mxu0 0
    %323 = vmatmul.mubr.bf16.gmra.mrb[0].mxu0 %v218
    %v324 = vpop.f32.mrb[0].mxu0
    %v325 = vadd.f32 %v240, %v324
    %v326 = vpop.f32.mrb[0].mxu0
    %v327 = vpop.f32.mrb[0].mxu0
    %v328 = vpop.f32.mrb[0].mxu0
    %329 = vdwg.mxu0
    %v330 = vmax.f32 %v325, 0.0
    %v331 = vpack.c.bf16 %v330, %v330
    %v332 = vld [vmem:[%s5] sm:$0xf]
    %v333 = vld [vmem:[%s5 + $0x4] sm:$0xf]
    %v334 = vld [vmem:[%s5 + $0x8] sm:$0xf]
    %v335 = vld [vmem:[%s5 + $0xc] sm:$0xf]
    %v336 = vld [vmem:[%s5 + $0x10] sm:$0xf]
    %v337 = vld [vmem:[%s5 + $0x14] sm:$0xf]
    %v338 = vld [vmem:[%s5 + $0x18] sm:$0xf]
    %v339 = vld [vmem:[%s5 + $0x1c] sm:$0xf]
    %v340 = vld [vmem:[%s6] sm:$0x1]
    %v342 = vlaneseq
    %v343 = vshrl.u32 %v342, 7
    %v344 = vsub.s32 0, %v343
    %v345 = vrot.slane %v340, %v344
    %v355 = vunpack.c.l.b16 %v332
    %v356 = vunpack.c.l.b16 %v333
    %v357 = vunpack.c.l.b16 %v334
    %v358 = vunpack.c.l.b16 %v335
    %v359 = vunpack.c.l.b16 %v336
    %v360 = vunpack.c.l.b16 %v337
    %v361 = vunpack.c.l.b16 %v338
    %v362 = vunpack.c.l.b16 %v339
    %v363 = vpack.c.b16 %v356, %v355
    %v364 = vpack.c.b16 %v358, %v357
    %v365 = vpack.c.b16 %v360, %v359
    %v366 = vpack.c.b16 %v362, %v361
    %vm371 = vcmask 523264
    %v373 = vsel %vm371, %v331, 0
    %375 = vmatprep.subr.bf16.mxu0 0
    %376 = vmatpush1.bf16.msra.mxu0 %v363
    %377 = vmatprep.subr.bf16.mxu0 0
    %378 = vmatpush1.bf16.msra.mxu0 %v364
    %379 = vmatprep.subr.bf16.mxu0 0
    %380 = vmatpush1.bf16.msra.mxu0 %v365
    %381 = vmatprep.subr.bf16.mxu0 0
    %382 = vmatpush1.bf16.msra.mxu0 %v366
    %383 = vmatprep.subr.bf16.mxu0 0
    %384 = vmatpush1.bf16.msra.mxu0 0
    %385 = vmatprep.subr.bf16.mxu0 0
    %386 = vmatpush1.bf16.msra.mxu0 0
    %387 = vmatprep.subr.bf16.mxu0 0
    %388 = vmatpush1.bf16.msra.mxu0 0
    %389 = vmatprep.subr.bf16.mxu0 0
    %390 = vmatpush1.bf16.msra.mxu0 0
    %391 = vmatprep.subr.bf16.mxu0 0
    %392 = vmatpush1.bf16.msra.mxu0 0
    %393 = vmatprep.subr.bf16.mxu0 0
    %394 = vmatpush1.bf16.msra.mxu0 0
    %395 = vmatprep.subr.bf16.mxu0 0
    %396 = vmatpush1.bf16.msra.mxu0 0
    %397 = vmatprep.subr.bf16.mxu0 0
    %398 = vmatpush1.bf16.msra.mxu0 0
    %399 = vmatprep.subr.bf16.mxu0 0
    %400 = vmatpush1.bf16.msra.mxu0 0
    %401 = vmatprep.subr.bf16.mxu0 0
    %402 = vmatpush1.bf16.msra.mxu0 0
    %403 = vmatprep.subr.bf16.mxu0 0
    %404 = vmatpush1.bf16.msra.mxu0 0
    %405 = vmatprep.subr.bf16.mxu0 0
    %406 = vmatpush1.bf16.msra.mxu0 0
    %407 = vmatprep.mubr.bf16.mxu0 0
    %408 = vmatmul.mubr.bf16.gmra.mrb[0].mxu0 %v373
    %v409 = vpop.f32.mrb[0].mxu0
    %v410 = vadd.f32 %v345, %v409
    %v411 = vpop.f32.mrb[0].mxu0
    %v412 = vpop.f32.mrb[0].mxu0
    %v413 = vpop.f32.mrb[0].mxu0
    %414 = vdwg.mxu0
    %v415 = vtanh.pop %v410
    %v416 = vpack.c.bf16 %v415, %v415
    %v417 = vld [vmem:[%s7] sm:$0xf]
    %v418 = vld [vmem:[%s7 + $0x4] sm:$0xf]
    %v419 = vld [vmem:[%s7 + $0x8] sm:$0xf]
    %v420 = vld [vmem:[%s7 + $0xc] sm:$0xf]
    %v421 = vld [vmem:[%s8] sm:$0x1]
    %v423 = vlaneseq
    %v424 = vshrl.u32 %v423, 7
    %v425 = vsub.s32 0, %v424
    %v426 = vrot.slane %v421, %v425
    %v432 = vunpack.c.l.b16 %v417
    %v433 = vunpack.c.l.b16 %v418
    %v434 = vunpack.c.l.b16 %v419
    %v435 = vunpack.c.l.b16 %v420
    %v436 = vpack.c.b16 %v433, %v432
    %v437 = vpack.c.b16 %v435, %v434
    %vm440 = vcmask 261120
    %v442 = vsel %vm440, %v416, 0
    %444 = vmatprep.subr.bf16.mxu0 0
    %445 = vmatpush1.bf16.msra.mxu0 %v436
    %446 = vmatprep.subr.bf16.mxu0 0
    %447 = vmatpush1.bf16.msra.mxu0 %v437
    %448 = vmatprep.subr.bf16.mxu0 0
    %449 = vmatpush1.bf16.msra.mxu0 0
    %450 = vmatprep.subr.bf16.mxu0 0
    %451 = vmatpush1.bf16.msra.mxu0 0
    %452 = vmatprep.subr.bf16.mxu0 0
    %453 = vmatpush1.bf16.msra.mxu0 0
    %454 = vmatprep.subr.bf16.mxu0 0
    %455 = vmatpush1.bf16.msra.mxu0 0
    %456 = vmatprep.subr.bf16.mxu0 0
    %457 = vmatpush1.bf16.msra.mxu0 0
    %458 = vmatprep.subr.bf16.mxu0 0
    %459 = vmatpush1.bf16.msra.mxu0 0
    %460 = vmatprep.subr.bf16.mxu0 0
    %461 = vmatpush1.bf16.msra.mxu0 0
    %462 = vmatprep.subr.bf16.mxu0 0
    %463 = vmatpush1.bf16.msra.mxu0 0
    %464 = vmatprep.subr.bf16.mxu0 0
    %465 = vmatpush1.bf16.msra.mxu0 0
    %466 = vmatprep.subr.bf16.mxu0 0
    %467 = vmatpush1.bf16.msra.mxu0 0
    %468 = vmatprep.subr.bf16.mxu0 0
    %469 = vmatpush1.bf16.msra.mxu0 0
    %470 = vmatprep.subr.bf16.mxu0 0
    %471 = vmatpush1.bf16.msra.mxu0 0
    %472 = vmatprep.subr.bf16.mxu0 0
    %473 = vmatpush1.bf16.msra.mxu0 0
    %474 = vmatprep.subr.bf16.mxu0 0
    %475 = vmatpush1.bf16.msra.mxu0 0
    %476 = vmatprep.mubr.bf16.mxu0 0
    %477 = vmatmul.mubr.bf16.gmra.mrb[0].mxu0 %v442
    %v478 = vpop.f32.mrb[0].mxu0
    %v479 = vadd.f32 %v426, %v478
    %v480 = vpop.f32.mrb[0].mxu0
    %v481 = vpop.f32.mrb[0].mxu0
    %v482 = vpop.f32.mrb[0].mxu0
    %483 = vdwg.mxu0
    %v484 = vmax.f32 %v479, 0.0
    %v485 = vlaneseq
    %v486 = vand.u32 %v485, 127
    %vm487 = vcmp.lt.s32.totalorder %v486, 10
    %v488 = vsel %vm487, %v484, -1e+30
    %489 = vmax.xlane.f32.xlu0 %v488
    %v490 = vpop.xlane.xlu0 %489
    %v491 = vsub.f32 %v488, %v490
    %v492 = vmul.f32 %v491, 1.442695
    %v493 = vpow.pop %v492
    %494 = vadd.xlane.f32.xlu0 %v493
    %v495 = vpop.xlane.xlu0 %494
    %v496 = vlog2.pop %v495
    %v497 = vmul.f32 %v496, 0.6931472
    %v498 = vsub.f32 %v491, %v497
    %499 = vst [vmem:[#allocation2] sm:$0xff] %v498
    // Predicated region
    $region38: #{neural_net_forward.1} parent=1 // pred_check
      _
    $region39: #{neural_net_forward.1} parent=1 // pred_check_branch
      %501 = sbr.rel (0) target = $region41
    $region40: #{neural_net_forward.1} parent=1 // pred_region
      %s503 = ssub.s32 128, 128
      %504 = vsyncadd [#allocation3], %s503
      %s506 = sshll.u32 [#allocation2], 4
      %s507 = int_to_ptr.vmem [resolvable:$true] %s506
      %509 = dma.vmem_to_hbm [thread:$0]  %s507, 128, %s9, [#allocation3]
    $region41: #{neural_net_forward.1} parent=1 // pred_fallthru
      _
    // Predicated region
    $region42: #{neural_net_forward.1} parent=1 // pred_check
      _
    $region43: #{neural_net_forward.1} parent=1 // pred_check_branch
      %511 = sbr.rel (0) target = $region45
    $region44: #{neural_net_forward.1} parent=1 // pred_region
      %512 = dma.done [#allocation3], 128
    $region45: #{neural_net_forward.1} parent=1 // pred_fallthru
      _
    %513 = vsyncpa [#allocation3], 1

</llo_original>
